<compile_context>
chip_gen: v7x
topology: tpu7x:2x2x1
jax: 0.10.0
libtpu: 0.0.40
codegen_flags: <defaults>
</compile_context>

<pallas_src>
import math
from enum import Enum
from functools import partial

import jax
import jax.numpy as jnp
from jax.experimental import pallas as pl
from jax.experimental.pallas import tpu as pltpu


class Perturb(Enum):
    NONE = 0
    PREV = 1
    NEXT = 2


# ---------------------------------------------------------------------------
# Synthetic base_func configuration (deterministic)
# ---------------------------------------------------------------------------
SHAPES = ((4, 8), (16,), (2, 4, 4))                  # component shapes of the flat state
SIZES = tuple(math.prod(s) for s in SHAPES)          # (32, 16, 32)
OFFSETS = tuple(sum(SIZES[:i]) for i in range(len(SIZES)))
N_FLAT = sum(SIZES)                                  # 80  (natural lane width of y)
PAD_OUT = 128                                        # lane-dense output width (one vreg of lanes)
TB_MAX = 512                                         # max batch-tile rows (sublane aligned)


def _round_up(x, m):
    return ((x + m - 1) // m) * m


def pack_params(weights, biases):
    """Pack per-component W_i / b_i into a block-diagonal (N_FLAT, 128) slab
    plus a separate resident (1, 128) bias row.

    y @ W_pack + t * b_pack == concat_i( y_i @ W_i + t * b_i ) on lanes [0, N_FLAT).
    Off-diagonal blocks and lanes >= N_FLAT are exactly zero, so components
    cannot leak into each other.
    """
    assert N_FLAT <= PAD_OUT, "flat state must fit in one 128-lane output tile"
    w_pack = jnp.zeros((N_FLAT, PAD_OUT), jnp.float32)
    b_pack = jnp.zeros((1, PAD_OUT), jnp.float32)
    for off, size, w, b in zip(OFFSETS, SIZES, weights, biases):
        w_pack = w_pack.at[off:off + size, off:off + size].set(w.astype(jnp.float32))
        b_pack = b_pack.at[0, off:off + size].set(b.astype(jnp.float32))
    return w_pack, b_pack


# ---------------------------------------------------------------------------
# Pallas kernel: tanh( y @ W_pack + t * b_pack ) for one batch tile
#   t_ref : (1,)            SMEM scalar
#   y_ref : (TB, N_FLAT)    VMEM batch tile (natural 80-lane width)
#   w_ref : (N_FLAT, 128)   VMEM, resident across all grid steps
#   b_ref : (1, 128)        VMEM, resident across all grid steps
#   o_ref : (TB, 128)       VMEM, lane-dense output tile
# ---------------------------------------------------------------------------
def _perturbed_base_kernel(t_ref, y_ref, w_ref, b_ref, o_ref):
    acc = jnp.dot(
        y_ref[...], w_ref[...],
        preferred_element_type=jnp.float32,
        precision=jax.lax.Precision.HIGHEST,          # true-f32 MXU result
    )
    acc = acc + t_ref[0] * b_ref[...]                  # one broadcast FMA (VPU)
    o_ref[...] = jnp.tanh(acc).astype(o_ref.dtype)     # EUP tanh, lane-dense store


# ---------------------------------------------------------------------------
# Wrapper: _PerturbFunc.forward semantics
# ---------------------------------------------------------------------------
@partial(jax.jit, static_argnames=("perturb",))
def perturb_func(t, y, w_pack, b_pack, *, perturb=Perturb.NONE):
    """forward(t, y, perturb): cast t to y.dtype, optionally nextafter, base_func(t, y).

    y: (N_FLAT,) or (B, N_FLAT) flat state(s)
    returns tuple of arrays shaped SHAPES (or (B, *shape_i) if batched)
    """
    assert isinstance(perturb, Perturb), "perturb argument must be of type Perturb enum"
    y = jnp.asarray(y)
    squeeze = (y.ndim == 1)
    y2d = y.reshape((1, N_FLAT)) if squeeze else y
    assert y2d.shape[1] == N_FLAT, y2d.shape
    B = y2d.shape[0]

    # t = t.to(y.dtype); optional one-ULP nudge in y's dtype (torch._nextafter
    # forward path), then cast to the f32 compute dtype.
    t = jnp.asarray(t).astype(y.dtype)
    if perturb is Perturb.NEXT:
        t = jnp.nextafter(t, t + 1)
    elif perturb is Perturb.PREV:
        t = jnp.nextafter(t, t - 1)
    t32 = t.astype(jnp.float32).reshape((1,))

    y32 = y2d.astype(jnp.float32)

    # Batch tile: as large as useful (mem-bound), but keep >= 2 grid steps when
    # B > 8 so the "parallel" axis shards across v7x's two TensorCores.
    tb = min(TB_MAX, _round_up(B, 8))
    if B > 8:
        tb = min(tb, _round_up(-(-B // 2), 8))
    b_pad = _round_up(B, tb)
    if b_pad != B:
        y32 = jnp.zeros((b_pad, N_FLAT), jnp.float32).at[:B].set(y32)

    out = pl.pallas_call(
        _perturbed_base_kernel,
        out_shape=jax.ShapeDtypeStruct((b_pad, PAD_OUT), jnp.float32),
        grid=(b_pad // tb,),
        in_specs=[
            pl.BlockSpec(memory_space=pltpu.MemorySpace.SMEM),     # t scalar
            pl.BlockSpec((tb, N_FLAT), lambda i: (i, 0)),          # y batch tile (80 lanes)
            pl.BlockSpec((N_FLAT, PAD_OUT), lambda i: (0, 0)),     # packed W (resident)
            pl.BlockSpec((1, PAD_OUT), lambda i: (0, 0)),          # packed bias row (resident)
        ],
        out_specs=pl.BlockSpec((tb, PAD_OUT), lambda i: (i, 0)),
        compiler_params=pltpu.CompilerParams(
            dimension_semantics=("parallel",)),                    # shard batch tiles across TCs
    )(t32, y32, w_pack, b_pack)

    # Layout plumbing only (fuses under jit): slice the lane-dense slab back
    # into the per-component shapes.
    comps = []
    for off, size, shape in zip(OFFSETS, SIZES, SHAPES):
        c = out[:B, off:off + size]
        comps.append(c.reshape(shape) if squeeze else c.reshape((B,) + shape))
    return tuple(comps)


# ---------------------------------------------------------------------------
# Pure-JAX reference (mirrors torch semantics)
# ---------------------------------------------------------------------------
def reference(t, y, weights, biases, *, perturb=Perturb.NONE):
    y = jnp.asarray(y)
    squeeze = (y.ndim == 1)
    y2d = (y.reshape((1, N_FLAT)) if squeeze else y).astype(jnp.float32)
    t = jnp.asarray(t).astype(jnp.float32)
    if perturb is Perturb.NEXT:
        t = jnp.nextafter(t, t + 1)
    elif perturb is Perturb.PREV:
        t = jnp.nextafter(t, t - 1)
    outs = []
    for off, size, shape, w, b in zip(OFFSETS, SIZES, SHAPES, weights, biases):
        pre = jnp.dot(y2d[:, off:off + size], w,
                      precision=jax.lax.Precision.HIGHEST) + t * b
        o = jnp.tanh(pre)
        outs.append(o.reshape(shape) if squeeze else o.reshape((y2d.shape[0],) + shape))
    return tuple(outs)


if __name__ == "__main__":
    key = jax.random.PRNGKey(0)
    k_yb, k_y1, *k_params = jax.random.split(key, 2 + len(SHAPES))

    B = 16
    y_batch = jax.random.normal(k_yb, (B, N_FLAT), dtype=jnp.float32)
    y_single = jax.random.normal(k_y1, (N_FLAT,), dtype=jnp.float32)
    t = jnp.float32(0.75)

    weights, biases = [], []
    for i, size in enumerate(SIZES):
        kw, kb = jax.random.split(k_params[i])
        weights.append(jax.random.normal(kw, (size, size), dtype=jnp.float32) * 0.1)
        biases.append(jax.random.normal(kb, (size,), dtype=jnp.float32) * 0.1)

    w_pack, b_pack = pack_params(weights, biases)   # done once, like module parameter setup

    # batched states, all three perturb modes
    for perturb in (Perturb.NONE, Perturb.NEXT, Perturb.PREV):
        outs = jax.block_until_ready(
            perturb_func(t, y_batch, w_pack, b_pack, perturb=perturb))
        refs = reference(t, y_batch, weights, biases, perturb=perturb)
        for o, r, shape in zip(outs, refs, SHAPES):
            assert o.shape == (B,) + shape, (o.shape, shape)
            assert jnp.allclose(o, r, atol=2e-5, rtol=1e-5), f"mismatch vs reference ({perturb})"

    # single (unbatched) state, as in the original forward(t, y)
    # (NOTE: at B<=8 a plain fused jnp expression would beat any pallas_call;
    #  kept on the kernel path here to exercise the same code.)
    outs1 = jax.block_until_ready(
        perturb_func(t, y_single, w_pack, b_pack, perturb=Perturb.NEXT))
    refs1 = reference(t, y_single, weights, biases, perturb=Perturb.NEXT)
    for o, r, shape in zip(outs1, refs1, SHAPES):
        assert o.shape == shape, (o.shape, shape)
        assert jnp.allclose(o, r, atol=2e-5, rtol=1e-5), "mismatch vs reference (single)"

    print("KERNEL_OK")
</pallas_src>

<mosaic_0001>
module attributes {stable_mosaic.version = 11 : i64} {
  func.func @_perturbed_base_kernel(%arg0: i32, %arg1: memref<1xf32, #tpu.memory_space<smem>>, %arg2: memref<8x80xf32, #tpu.memory_space<vmem>>, %arg3: memref<80x128xf32, #tpu.memory_space<vmem>>, %arg4: memref<1x128xf32, #tpu.memory_space<vmem>>, %arg5: memref<8x128xf32, #tpu.memory_space<vmem>>) attributes {dimension_semantics = [#tpu.dimension_semantics<parallel>], iteration_bounds = array<i64: 2>, scalar_prefetch = 0 : i64, scratch_operands = 0 : i64, tpu.core_type = #tpu.core_type<tc>, window_params = [{transform_indices = @transform_0, window_bounds = array<i64: 1>}, {transform_indices = @transform_1, window_bounds = array<i64: 8, 80>}, {pipeline_mode = #tpu.pipeline_mode<synchronous>, transform_indices = @transform_2, window_bounds = array<i64: 80, 128>}, {pipeline_mode = #tpu.pipeline_mode<synchronous>, transform_indices = @transform_3, window_bounds = array<i64: 1, 128>}, {transform_indices = @transform_4, window_bounds = array<i64: 8, 128>}]} {
    %c0 = arith.constant 0 : index
    %c0_0 = arith.constant 0 : index
    %0 = vector.load %arg2[%c0, %c0_0] : memref<8x80xf32, #tpu.memory_space<vmem>>, vector<8x80xf32>
    %c0_1 = arith.constant 0 : index
    %c0_2 = arith.constant 0 : index
    %1 = vector.load %arg3[%c0_1, %c0_2] : memref<80x128xf32, #tpu.memory_space<vmem>>, vector<80x128xf32>
    %cst = arith.constant dense<0.000000e+00> : vector<8x128xf32>
    %2 = tpu.matmul %0, %1, %cst {dimension_numbers = #tpu.dot_dimension_numbers<[1], [0], [0], [1], [0, 0, 1, 1], [], []>, precision = #tpu.contract_precision<fp32>} : vector<8x80xf32>, vector<80x128xf32>, vector<8x128xf32> -> vector<8x128xf32>
    %c0_3 = arith.constant 0 : index
    %3 = memref.load %arg1[%c0_3] : memref<1xf32, #tpu.memory_space<smem>>
    %c0_4 = arith.constant 0 : index
    %c0_5 = arith.constant 0 : index
    %4 = vector.load %arg4[%c0_4, %c0_5] : memref<1x128xf32, #tpu.memory_space<vmem>>, vector<1x128xf32>
    %5 = vector.broadcast %3 : f32 to vector<1x128xf32>
    %6 = arith.mulf %5, %4 : vector<1x128xf32>
    %7 = vector.broadcast %6 : vector<1x128xf32> to vector<8x128xf32>
    %8 = arith.addf %2, %7 : vector<8x128xf32>
    %9 = math.tanh %8 : vector<8x128xf32>
    %c0_6 = arith.constant 0 : index
    %c0_7 = arith.constant 0 : index
    %10 = vector.load %arg5[%c0_6, %c0_7] : memref<8x128xf32, #tpu.memory_space<vmem>>, vector<8x128xf32>
    tpu.vector_store %arg5[%c0_6, %c0_7], %9 {strides = array<i32>} : memref<8x128xf32, #tpu.memory_space<vmem>>, vector<8x128xf32>,
    return
  }
  func.func @transform_0(%arg0: i32) -> i32 {
    %c0_i32 = arith.constant 0 : i32
    %c0_i32_0 = arith.constant 0 : i32
    return %c0_i32 : i32
  }
  func.func @transform_1(%arg0: i32) -> (i32, i32) {
    %c0_i32 = arith.constant 0 : i32
    %c0_i32_0 = arith.constant 0 : i32
    return %arg0, %c0_i32 : i32, i32
  }
  func.func @transform_2(%arg0: i32) -> (i32, i32) {
    %c0_i32 = arith.constant 0 : i32
    %c0_i32_0 = arith.constant 0 : i32
    %c0_i32_1 = arith.constant 0 : i32
    return %c0_i32, %c0_i32_0 : i32, i32
  }
  func.func @transform_3(%arg0: i32) -> (i32, i32) {
    %c0_i32 = arith.constant 0 : i32
    %c0_i32_0 = arith.constant 0 : i32
    %c0_i32_1 = arith.constant 0 : i32
    return %c0_i32, %c0_i32_0 : i32, i32
  }
  func.func @transform_4(%arg0: i32) -> (i32, i32) {
    %c0_i32 = arith.constant 0 : i32
    %c0_i32_0 = arith.constant 0 : i32
    return %arg0, %c0_i32 : i32, i32
  }
}

</mosaic_0001>

<llo_original>
// kernel: perturb_func.1
$region0: #{perturb_func.1}
  #allocation0 [shape = 'u32[]', space=smem, size = 0x4, offset = 0x4, fixed_abs, tag = 'smem constant byte address 0x4 - core index']
  #allocation1 [shape = 'u32[144,128]{1,0:T(1,128)}', space=vmem, size = 0x12000, scoped, tag = 'internal scratch']
  #allocation2 [shape = 'f32[1]{0:T(128)S(6)}', space=smem, size = 0x200, scoped, tag = 'scoped memory for perturb_func.1']
  %s0 = inlined_call_operand.<no memory space> [shape: f32[1], index: 0, kind: input, shape index: {}]
  %s1 = inlined_call_operand.hbm [shape: f32[16,80], index: 1, kind: input, shape index: {}]
  %s2 = inlined_call_operand.hbm [shape: f32[80,128], index: 2, kind: input, shape index: {}]
  %s3 = inlined_call_operand.vmem [shape: f32[1,128], index: 3, kind: input, shape index: {}]
  %s4 = inlined_call_operand.vmem [shape: f32[16,128], index: 4, kind: output, shape index: {}]
  %s5 = sld [smem:[#allocation0]]
  $region57: #{perturb_func.1} parent=0
    _
  %s7 = ssub.s32 1, %s5
  %s8 = scalar_select 0, %s7, %s5
  %9 = sst [smem:[#allocation2]] %s0
  $region1: #{perturb_func.1} parent=0
    #allocation3 [shape = 'u8[8192]{0}', space=vmem, size = 0x2000, scoped, tag = 'input window, operand 1']
    #allocation4 [shape = 's32[2]{0}', space=sflag, size = 0x8, scoped, tag = 'scoped memory for perturb_func.1']
    #allocation5 [shape = 'u8[40960]{0}', space=vmem, size = 0xa000, scoped, tag = 'input window, operand 2, single buffered']
    #allocation6 [shape = 's32[1]{0}', space=sflag, size = 0x4, scoped, tag = 'scoped memory for perturb_func.1']
    %10 = vsyncpa [#allocation4], 0
    %s11 = scalar_lea.sflag [#allocation4], 1
    %12 = vsyncpa %s11, 0
    %13 = vsyncpa [#allocation6], 0
    loop: start=0, step=1, limit=4
    $region2: #{perturb_func.1} parent=1 // loop_pre_header
      _
    $region3: #{perturb_func.1} parent=1 // loop_header
      %s15 = sphi 0, %s19
      %p16 = scmp.ge.s32.totalorder %s15, 4
      %s23 = sphi 0, %s23
      %s25 = sphi 0, %s23
      %s26 = sphi 0, %s25
      %s40 = sphi 0, %s26
      %s46 = sphi 0, %s48
      %s49 = sphi 0, %s46
      %s50 = sphi 0, %s49
      %s66 = sphi 0, %s50
      %s70 = sphi 0, %s70
      %s72 = sphi 0, %s70
      %s73 = sphi 0, %s72
      %s87 = sphi 0, %s73
      %s91 = sphi 0, %s91
      %s93 = sphi 0, %s91
      %s94 = sphi 0, %s93
      %s108 = sphi 0, %s94
      %s114 = sphi 0, %s116
      %s117 = sphi 0, %s114
      %s118 = sphi 0, %s117
      %s134 = sphi 0, %s118
    $region4: #{perturb_func.1} parent=1 // loop_header_branch
      %18 = sbr.rel (%p16) target = $region8
    $region5: #{perturb_func.1} parent=1 // loop_body
      %s20 = ssub.s32 %s15, 1
      %s21 = ssub.s32 %s15, 2
      %s22 = sadd.s32 %s15, 1
      %s24 = sadd.s32 %s23, 1
      %p27 = scmp.eq.s32.totalorder %s15, 1
      %p28 = scmp.ne.s32.totalorder %s23, %s25
      %p29 = scmp.eq.s32.totalorder %s15, 0
      %p30 = por %p28, %p29
      %p31 = scmp.ne.s32.totalorder %s23, %s25
      %p32 = scmp.eq.s32.totalorder %s20, 1
      %p33 = por %p31, %p32
      %p34 = scmp.ne.s32.totalorder %s25, %s26
      %p35 = scmp.eq.s32.totalorder %s20, 0
      %p36 = por %p34, %p35
      %p37 = scmp.ne.s32.totalorder %s25, %s26
      %p38 = scmp.eq.s32.totalorder %s21, 1
      %p39 = por %p37, %p38
      %p41 = scmp.ne.s32.totalorder %s26, %s40
      %p42 = scmp.eq.s32.totalorder %s21, 0
      %p43 = por %p41, %p42
      %s44 = ssub.s32 %s15, %s22
      %p45 = scmp.eq.s32.totalorder %s44, 0
      %s47 = sadd.s32 %s46, 1
      %s48 = scalar_select %p45, %s46, %s47
      %p51 = pneg %p45
      %p52 = scmp.eq.s32.totalorder %s15, 1
      %p53 = por %p51, %p52
      %p54 = scmp.ne.s32.totalorder %s46, %s49
      %p55 = scmp.eq.s32.totalorder %s15, 0
      %p56 = por %p54, %p55
      %p57 = scmp.ne.s32.totalorder %s46, %s49
      %p58 = scmp.eq.s32.totalorder %s20, 1
      %p59 = por %p57, %p58
      %p60 = scmp.ne.s32.totalorder %s49, %s50
      %p61 = scmp.eq.s32.totalorder %s20, 0
      %p62 = por %p60, %p61
      %p63 = scmp.ne.s32.totalorder %s49, %s50
      %p64 = scmp.eq.s32.totalorder %s21, 1
      %p65 = por %p63, %p64
      %p67 = scmp.ne.s32.totalorder %s50, %s66
      %p68 = scmp.eq.s32.totalorder %s21, 0
      %p69 = por %p67, %p68
      %s71 = sadd.s32 %s70, 1
      %p74 = scmp.eq.s32.totalorder %s15, 1
      %p75 = scmp.ne.s32.totalorder %s70, %s72
      %p76 = scmp.eq.s32.totalorder %s15, 0
      %p77 = por %p75, %p76
      %p78 = scmp.ne.s32.totalorder %s70, %s72
      %p79 = scmp.eq.s32.totalorder %s20, 1
      %p80 = por %p78, %p79
      %p81 = scmp.ne.s32.totalorder %s72, %s73
      %p82 = scmp.eq.s32.totalorder %s20, 0
      %p83 = por %p81, %p82
      %p84 = scmp.ne.s32.totalorder %s72, %s73
      %p85 = scmp.eq.s32.totalorder %s21, 1
      %p86 = por %p84, %p85
      %p88 = scmp.ne.s32.totalorder %s73, %s87
      %p89 = scmp.eq.s32.totalorder %s21, 0
      %p90 = por %p88, %p89
      %s92 = sadd.s32 %s91, 1
      %p95 = scmp.eq.s32.totalorder %s15, 1
      %p96 = scmp.ne.s32.totalorder %s91, %s93
      %p97 = scmp.eq.s32.totalorder %s15, 0
      %p98 = por %p96, %p97
      %p99 = scmp.ne.s32.totalorder %s91, %s93
      %p100 = scmp.eq.s32.totalorder %s20, 1
      %p101 = por %p99, %p100
      %p102 = scmp.ne.s32.totalorder %s93, %s94
      %p103 = scmp.eq.s32.totalorder %s20, 0
      %p104 = por %p102, %p103
      %p105 = scmp.ne.s32.totalorder %s93, %s94
      %p106 = scmp.eq.s32.totalorder %s21, 1
      %p107 = por %p105, %p106
      %p109 = scmp.ne.s32.totalorder %s94, %s108
      %p110 = scmp.eq.s32.totalorder %s21, 0
      %p111 = por %p109, %p110
      %s112 = ssub.s32 %s15, %s22
      %p113 = scmp.eq.s32.totalorder %s112, 0
      %s115 = sadd.s32 %s114, 1
      %s116 = scalar_select %p113, %s114, %s115
      %p119 = pneg %p113
      %p120 = scmp.eq.s32.totalorder %s15, 1
      %p121 = por %p119, %p120
      %p122 = scmp.ne.s32.totalorder %s114, %s117
      %p123 = scmp.eq.s32.totalorder %s15, 0
      %p124 = por %p122, %p123
      %p125 = scmp.ne.s32.totalorder %s114, %s117
      %p126 = scmp.eq.s32.totalorder %s20, 1
      %p127 = por %p125, %p126
      %p128 = scmp.ne.s32.totalorder %s117, %s118
      %p129 = scmp.eq.s32.totalorder %s20, 0
      %p130 = por %p128, %p129
      %p131 = scmp.ne.s32.totalorder %s117, %s118
      %p132 = scmp.eq.s32.totalorder %s21, 1
      %p133 = por %p131, %p132
      %p135 = scmp.ne.s32.totalorder %s118, %s134
      %p136 = scmp.eq.s32.totalorder %s21, 0
      %p137 = por %p135, %p136
      %p138 = scmp.le.s32.totalorder 1, %s15
      %p139 = scmp.lt.s32.totalorder %s15, 3
      %p140 = pnand %p138, %p139
      %p141 = pneg %p140
      // Predicated region
      $region9: #{perturb_func.1} parent=5 // pred_check
        _
      $region10: #{perturb_func.1} parent=5 // pred_check_branch
        %143 = sbr.rel (%p140) target = $region12
      $region11: #{perturb_func.1} parent=5 // pred_region
        %s144 = ssub.s32 %s15, 1
        // Predicated region
        $region13: #{perturb_func.1} parent=11 // pred_check
          %p145 = pneg %p36
        $region14: #{perturb_func.1} parent=11 // pred_check_branch
          %147 = sbr.rel (%p145) target = $region16
        $region15: #{perturb_func.1} parent=11 // pred_region
          _
        $region16: #{perturb_func.1} parent=11 // pred_fallthru
          _
        // Predicated region
        $region17: #{perturb_func.1} parent=11 // pred_check
          %p148 = pneg %p83
        $region18: #{perturb_func.1} parent=11 // pred_check_branch
          %150 = sbr.rel (%p148) target = $region20
        $region19: #{perturb_func.1} parent=11 // pred_region
          %s152 = ssub.s32 1280, 1280
          %153 = vsyncadd [#allocation6], %s152
          %s154 = sshll.u32 [#allocation5], 4
          %s155 = int_to_ptr.vmem [resolvable:$true] %s154
          %160 = dma.hbm_to_vmem [thread:$0]  %s2, 1280, %s155, [#allocation6], 128, 128, 8
        $region20: #{perturb_func.1} parent=11 // pred_fallthru
          _
        // Predicated region
        $region21: #{perturb_func.1} parent=11 // pred_check
          %p161 = pneg %p104
        $region22: #{perturb_func.1} parent=11 // pred_check_branch
          %163 = sbr.rel (%p161) target = $region24
        $region23: #{perturb_func.1} parent=11 // pred_region
          _
        $region24: #{perturb_func.1} parent=11 // pred_fallthru
          _
      $region12: #{perturb_func.1} parent=5 // pred_fallthru
        _
      %p164 = scmp.lt.s32.totalorder %s15, 2
      // Predicated region
      $region25: #{perturb_func.1} parent=5 // pred_check
        %p165 = pneg %p164
      $region26: #{perturb_func.1} parent=5 // pred_check_branch
        %167 = sbr.rel (%p165) target = $region28
      $region27: #{perturb_func.1} parent=5 // pred_region
        // Predicated region
        $region29: #{perturb_func.1} parent=27 // pred_check
          %p168 = pneg %p56
        $region30: #{perturb_func.1} parent=27 // pred_check_branch
          %170 = sbr.rel (%p168) target = $region32
        $region31: #{perturb_func.1} parent=27 // pred_region
          %s171 = sand.u32 %s46, 1
          %s172 = scalar_lea.sflag [#allocation4], %s171
          %s173 = sand.u32 %s46, 1
          %s174 = smul.addr %s173, 8
          %s175 = scalar_lea.vmem [#allocation3], %s174
          %s177 = ssub.s32 128, 128
          %178 = vsyncadd %s172, %s177
          %s179 = smul.addr %s15, 128
          %s180 = scalar_lea.hbm %s1, %s179
          %s182 = sshll.u32 %s175, 4
          %s183 = int_to_ptr.vmem [resolvable:$true] %s182
          %185 = dma.hbm_to_vmem [thread:$0]  %s180, 128, %s183, %s172
        $region32: #{perturb_func.1} parent=27 // pred_fallthru
          _
      $region28: #{perturb_func.1} parent=5 // pred_fallthru
        _
      %p186 = scmp.le.s32.totalorder 1, %s15
      %p187 = scmp.lt.s32.totalorder %s15, 3
      %p188 = pnand %p186, %p187
      %p189 = pneg %p188
      // Predicated region
      $region33: #{perturb_func.1} parent=5 // pred_check
        _
      $region34: #{perturb_func.1} parent=5 // pred_check_branch
        %191 = sbr.rel (%p188) target = $region36
      $region35: #{perturb_func.1} parent=5 // pred_region
        %s192 = ssub.s32 %s15, 1
        %s193 = sand.u32 %s49, 1
        %s194 = scalar_lea.sflag [#allocation4], %s193
        %s195 = sand.u32 %s49, 1
        %s196 = smul.addr %s195, 8
        %s197 = scalar_lea.vmem [#allocation3], %s196
        // Predicated region
        $region37: #{perturb_func.1} parent=35 // pred_check
          %p198 = pneg %p62
        $region38: #{perturb_func.1} parent=35 // pred_check_branch
          %200 = sbr.rel (%p198) target = $region40
        $region39: #{perturb_func.1} parent=35 // pred_region
          %201 = dma.done %s194, 128
        $region40: #{perturb_func.1} parent=35 // pred_fallthru
          _
        // Predicated region
        $region41: #{perturb_func.1} parent=35 // pred_check
          %p202 = pneg %p83
        $region42: #{perturb_func.1} parent=35 // pred_check_branch
          %204 = sbr.rel (%p202) target = $region44
        $region43: #{perturb_func.1} parent=35 // pred_region
          %205 = dma.done [#allocation6], 1280
        $region44: #{perturb_func.1} parent=35 // pred_fallthru
          _
        %p206 = pneg %p36
        %p207 = pneg %p33
        %s208 = sand.u32 %s49, 1
        %s209 = scalar_lea.sflag [#allocation4], %s208
        %s210 = sand.u32 %s49, 1
        %s211 = smul.addr %s210, 8
        %s212 = scalar_lea.vmem [#allocation3], %s211
        %p213 = pneg %p62
        %p214 = pneg %p59
        %p215 = pneg %p83
        %p216 = pneg %p80
        %p217 = pneg %p104
        %p218 = pneg %p101
        %p219 = pneg %p130
        %p220 = pneg %p127
        %p221 = scmp.lt.s32.totalorder %s20, 1
        %s222 = scalar_select %p221, %s20, 1
        %s223 = smul.addr %s222, 8
        %s224 = scalar_lea.vmem %s4, %s223
        %p225 = scmp.lt.s32.totalorder %s20, 1
        %s226 = scalar_select %p225, %s20, 1
        %s227 = smul.addr %s226, 8
        %s228 = scalar_lea.vmem %s4, %s227
        %v229 = vld [vmem:[%s197] sm:$0xff]
        %v230 = vld [vmem:[#allocation5] sm:$0xff]
        %v231 = vld [vmem:[#allocation5 + $0x8] sm:$0xff]
        %v232 = vld [vmem:[#allocation5 + $0x10] sm:$0xff]
        %v233 = vld [vmem:[#allocation5 + $0x18] sm:$0xff]
        %v234 = vld [vmem:[#allocation5 + $0x20] sm:$0xff]
        %v235 = vld [vmem:[#allocation5 + $0x28] sm:$0xff]
        %v236 = vld [vmem:[#allocation5 + $0x30] sm:$0xff]
        %v237 = vld [vmem:[#allocation5 + $0x38] sm:$0xff]
        %v238 = vld [vmem:[#allocation5 + $0x40] sm:$0xff]
        %v239 = vld [vmem:[#allocation5 + $0x48] sm:$0xff]
        %s240 = sld [smem:[#allocation2]]
        %v241 = vld [vmem:[%s3] sm:$0x1]
        %v242 = vstv %s240
        %v243 = vmul.f32 %v242, %v241
        %v245 = vlaneseq
        %v246 = vshrl.u32 %v245, 7
        %v247 = vsub.s32 0, %v246
        %v248 = vrot.slane %v243, %v247
        %vm250 = vcmask 654336
        %v252 = vsel %vm250, %v229, 0
        %254 = vmatprep.subr.mxu0 0.0
        %v255 = vand.u32 %v230, 4294901760
        %256 = vmatpush1.msra.mxu0 %v255
        %257 = vmatprep.subr.mxu0 0.0
        %v258 = vand.u32 %v231, 4294901760
        %259 = vmatpush1.msra.mxu0 %v258
        %260 = vmatprep.subr.mxu0 0.0
        %v261 = vand.u32 %v232, 4294901760
        %262 = vmatpush1.msra.mxu0 %v261
        %263 = vmatprep.subr.mxu0 0.0
        %v264 = vand.u32 %v233, 4294901760
        %265 = vmatpush1.msra.mxu0 %v264
        %266 = vmatprep.subr.mxu0 0.0
        %v267 = vand.u32 %v234, 4294901760
        %268 = vmatpush1.msra.mxu0 %v267
        %269 = vmatprep.subr.mxu0 0.0
        %v270 = vand.u32 %v235, 4294901760
        %271 = vmatpush1.msra.mxu0 %v270
        %272 = vmatprep.subr.mxu0 0.0
        %v273 = vand.u32 %v236, 4294901760
        %274 = vmatpush1.msra.mxu0 %v273
        %275 = vmatprep.subr.mxu0 0.0
        %v276 = vand.u32 %v237, 4294901760
        %277 = vmatpush1.msra.mxu0 %v276
        %278 = vmatprep.subr.mxu0 0.0
        %v279 = vand.u32 %v238, 4294901760
        %280 = vmatpush1.msra.mxu0 %v279
        %281 = vmatprep.subr.mxu0 0.0
        %v282 = vand.u32 %v239, 4294901760
        %283 = vmatpush1.msra.mxu0 %v282
        %284 = vmatprep.subr.mxu0 0.0
        %285 = vmatpush1.msra.mxu0 0.0
        %286 = vmatprep.subr.mxu0 0.0
        %287 = vmatpush1.msra.mxu0 0.0
        %288 = vmatprep.subr.mxu0 0.0
        %289 = vmatpush1.msra.mxu0 0.0
        %290 = vmatprep.subr.mxu0 0.0
        %291 = vmatpush1.msra.mxu0 0.0
        %292 = vmatprep.subr.mxu0 0.0
        %293 = vmatpush1.msra.mxu0 0.0
        %294 = vmatprep.subr.mxu0 0.0
        %295 = vmatpush1.msra.mxu0 0.0
        %296 = vmatprep.subr.mxu0 0.0
        %297 = vmatpush1.msra.mxu0 0.0
        %298 = vmatprep.subr.mxu0 0.0
        %299 = vmatpush1.msra.mxu0 0.0
        %300 = vmatprep.subr.mxu0 0.0
        %301 = vmatpush1.msra.mxu0 0.0
        %302 = vmatprep.subr.mxu0 0.0
        %303 = vmatpush1.msra.mxu0 0.0
        %304 = vmatprep.subr.mxu0 0.0
        %305 = vmatpush1.msra.mxu0 0.0
        %306 = vmatprep.subr.mxu0 0.0
        %307 = vmatpush1.msra.mxu0 0.0
        %308 = vmatprep.subr.mxu0 0.0
        %309 = vmatpush1.msra.mxu0 0.0
        %310 = vmatprep.subr.mxu0 0.0
        %311 = vmatpush1.msra.mxu0 0.0
        %312 = vmatprep.subr.mxu0 0.0
        %313 = vmatpush1.msra.mxu0 0.0
        %314 = vmatprep.subr.mxu0 0.0
        %315 = vmatpush1.msra.mxu0 0.0
        %316 = vmatprep.subr.mxu0 0.0
        %317 = vmatpush1.msra.mxu0 0.0
        %318 = vmatprep.subr.mxu0 0.0
        %319 = vmatpush1.msra.mxu0 0.0
        %320 = vmatprep.subr.mxu0 0.0
        %321 = vmatpush1.msra.mxu0 0.0
        %322 = vmatprep.subr.mxu0 0.0
        %323 = vmatpush1.msra.mxu0 0.0
        %324 = vmatprep.subr.mxu0 0.0
        %325 = vmatpush1.msra.mxu0 0.0
        %326 = vmatprep.subr.mxu0 0.0
        %327 = vmatpush1.msra.mxu0 0.0
        %328 = vmatprep.mubr.f32.mxu0 0.0
        %v329 = vand.u32 %v252, 4294901760
        %v330 = vsub.f32 %v252, %v329
        %v331 = vand.u32 %v330, 4294901760
        %v332 = vsub.f32 %v330, %v331
        %v333 = vand.u32 %v332, 4294901760
        %334 = vmatmul.mubr.f32.gmra.mrb[0].mxu0 %v333
        %v335 = vpop.f32.mrb[0].mxu0
        %v336 = vadd.f32 %v248, %v335
        %v337 = vpop.f32.mrb[0].mxu0
        %338 = vdwg.mxu0
        %339 = vmatprep.subr.mxu0 0.0
        %v340 = vand.u32 %v230, 4294901760
        %v341 = vsub.f32 %v230, %v340
        %v342 = vand.u32 %v341, 4294901760
        %v343 = vsub.f32 %v341, %v342
        %v344 = vand.u32 %v343, 4294901760
        %345 = vmatpush1.msra.mxu0 %v344
        %346 = vmatprep.subr.mxu0 0.0
        %v347 = vand.u32 %v231, 4294901760
        %v348 = vsub.f32 %v231, %v347
        %v349 = vand.u32 %v348, 4294901760
        %v350 = vsub.f32 %v348, %v349
        %v351 = vand.u32 %v350, 4294901760
        %352 = vmatpush1.msra.mxu0 %v351
        %353 = vmatprep.subr.mxu0 0.0
        %v354 = vand.u32 %v232, 4294901760
        %v355 = vsub.f32 %v232, %v354
        %v356 = vand.u32 %v355, 4294901760
        %v357 = vsub.f32 %v355, %v356
        %v358 = vand.u32 %v357, 4294901760
        %359 = vmatpush1.msra.mxu0 %v358
        %360 = vmatprep.subr.mxu0 0.0
        %v361 = vand.u32 %v233, 4294901760
        %v362 = vsub.f32 %v233, %v361
        %v363 = vand.u32 %v362, 4294901760
        %v364 = vsub.f32 %v362, %v363
        %v365 = vand.u32 %v364, 4294901760
        %366 = vmatpush1.msra.mxu0 %v365
        %367 = vmatprep.subr.mxu0 0.0
        %v368 = vand.u32 %v234, 4294901760
        %v369 = vsub.f32 %v234, %v368
        %v370 = vand.u32 %v369, 4294901760
        %v371 = vsub.f32 %v369, %v370
        %v372 = vand.u32 %v371, 4294901760
        %373 = vmatpush1.msra.mxu0 %v372
        %374 = vmatprep.subr.mxu0 0.0
        %v375 = vand.u32 %v235, 4294901760
        %v376 = vsub.f32 %v235, %v375
        %v377 = vand.u32 %v376, 4294901760
        %v378 = vsub.f32 %v376, %v377
        %v379 = vand.u32 %v378, 4294901760
        %380 = vmatpush1.msra.mxu0 %v379
        %381 = vmatprep.subr.mxu0 0.0
        %v382 = vand.u32 %v236, 4294901760
        %v383 = vsub.f32 %v236, %v382
        %v384 = vand.u32 %v383, 4294901760
        %v385 = vsub.f32 %v383, %v384
        %v386 = vand.u32 %v385, 4294901760
        %387 = vmatpush1.msra.mxu0 %v386
        %388 = vmatprep.subr.mxu0 0.0
        %v389 = vand.u32 %v237, 4294901760
        %v390 = vsub.f32 %v237, %v389
        %v391 = vand.u32 %v390, 4294901760
        %v392 = vsub.f32 %v390, %v391
        %v393 = vand.u32 %v392, 4294901760
        %394 = vmatpush1.msra.mxu0 %v393
        %395 = vmatprep.subr.mxu0 0.0
        %v396 = vand.u32 %v238, 4294901760
        %v397 = vsub.f32 %v238, %v396
        %v398 = vand.u32 %v397, 4294901760
        %v399 = vsub.f32 %v397, %v398
        %v400 = vand.u32 %v399, 4294901760
        %401 = vmatpush1.msra.mxu0 %v400
        %402 = vmatprep.subr.mxu0 0.0
        %v403 = vand.u32 %v239, 4294901760
        %v404 = vsub.f32 %v239, %v403
        %v405 = vand.u32 %v404, 4294901760
        %v406 = vsub.f32 %v404, %v405
        %v407 = vand.u32 %v406, 4294901760
        %408 = vmatpush1.msra.mxu0 %v407
        %409 = vmatprep.subr.mxu0 0.0
        %410 = vmatpush1.msra.mxu0 0.0
        %411 = vmatprep.subr.mxu0 0.0
        %412 = vmatpush1.msra.mxu0 0.0
        %413 = vmatprep.subr.mxu0 0.0
        %414 = vmatpush1.msra.mxu0 0.0
        %415 = vmatprep.subr.mxu0 0.0
        %416 = vmatpush1.msra.mxu0 0.0
        %417 = vmatprep.subr.mxu0 0.0
        %418 = vmatpush1.msra.mxu0 0.0
        %419 = vmatprep.subr.mxu0 0.0
        %420 = vmatpush1.msra.mxu0 0.0
        %421 = vmatprep.subr.mxu0 0.0
        %422 = vmatpush1.msra.mxu0 0.0
        %423 = vmatprep.subr.mxu0 0.0
        %424 = vmatpush1.msra.mxu0 0.0
        %425 = vmatprep.subr.mxu0 0.0
        %426 = vmatpush1.msra.mxu0 0.0
        %427 = vmatprep.subr.mxu0 0.0
        %428 = vmatpush1.msra.mxu0 0.0
        %429 = vmatprep.subr.mxu0 0.0
        %430 = vmatpush1.msra.mxu0 0.0
        %431 = vmatprep.subr.mxu0 0.0
        %432 = vmatpush1.msra.mxu0 0.0
        %433 = vmatprep.subr.mxu0 0.0
        %434 = vmatpush1.msra.mxu0 0.0
        %435 = vmatprep.subr.mxu0 0.0
        %436 = vmatpush1.msra.mxu0 0.0
        %437 = vmatprep.subr.mxu0 0.0
        %438 = vmatpush1.msra.mxu0 0.0
        %439 = vmatprep.subr.mxu0 0.0
        %440 = vmatpush1.msra.mxu0 0.0
        %441 = vmatprep.subr.mxu0 0.0
        %442 = vmatpush1.msra.mxu0 0.0
        %443 = vmatprep.subr.mxu0 0.0
        %444 = vmatpush1.msra.mxu0 0.0
        %445 = vmatprep.subr.mxu0 0.0
        %446 = vmatpush1.msra.mxu0 0.0
        %447 = vmatprep.subr.mxu0 0.0
        %448 = vmatpush1.msra.mxu0 0.0
        %449 = vmatprep.subr.mxu0 0.0
        %450 = vmatpush1.msra.mxu0 0.0
        %451 = vmatprep.subr.mxu0 0.0
        %452 = vmatpush1.msra.mxu0 0.0
        %453 = vmatprep.mubr.f32.mxu0 0.0
        %v454 = vand.u32 %v252, 4294901760
        %455 = vmatmul.mubr.f32.gmra.mrb[0].mxu0 %v454
        %v456 = vpop.f32.mrb[0].mxu0
        %v457 = vadd.f32 %v336, %v456
        %v458 = vpop.f32.mrb[0].mxu0
        %459 = vdwg.mxu0
        %460 = vmatprep.subr.mxu0 0.0
        %v461 = vand.u32 %v230, 4294901760
        %v462 = vsub.f32 %v230, %v461
        %463 = vmatpush1.msra.mxu0 %v462
        %464 = vmatprep.subr.mxu0 0.0
        %v465 = vand.u32 %v231, 4294901760
        %v466 = vsub.f32 %v231, %v465
        %467 = vmatpush1.msra.mxu0 %v466
        %468 = vmatprep.subr.mxu0 0.0
        %v469 = vand.u32 %v232, 4294901760
        %v470 = vsub.f32 %v232, %v469
        %471 = vmatpush1.msra.mxu0 %v470
        %472 = vmatprep.subr.mxu0 0.0
        %v473 = vand.u32 %v233, 4294901760
        %v474 = vsub.f32 %v233, %v473
        %475 = vmatpush1.msra.mxu0 %v474
        %476 = vmatprep.subr.mxu0 0.0
        %v477 = vand.u32 %v234, 4294901760
        %v478 = vsub.f32 %v234, %v477
        %479 = vmatpush1.msra.mxu0 %v478
        %480 = vmatprep.subr.mxu0 0.0
        %v481 = vand.u32 %v235, 4294901760
        %v482 = vsub.f32 %v235, %v481
        %483 = vmatpush1.msra.mxu0 %v482
        %484 = vmatprep.subr.mxu0 0.0
        %v485 = vand.u32 %v236, 4294901760
        %v486 = vsub.f32 %v236, %v485
        %487 = vmatpush1.msra.mxu0 %v486
        %488 = vmatprep.subr.mxu0 0.0
        %v489 = vand.u32 %v237, 4294901760
        %v490 = vsub.f32 %v237, %v489
        %491 = vmatpush1.msra.mxu0 %v490
        %492 = vmatprep.subr.mxu0 0.0
        %v493 = vand.u32 %v238, 4294901760
        %v494 = vsub.f32 %v238, %v493
        %495 = vmatpush1.msra.mxu0 %v494
        %496 = vmatprep.subr.mxu0 0.0
        %v497 = vand.u32 %v239, 4294901760
        %v498 = vsub.f32 %v239, %v497
        %499 = vmatpush1.msra.mxu0 %v498
        %500 = vmatprep.subr.mxu0 0.0
        %501 = vmatpush1.msra.mxu0 0.0
        %502 = vmatprep.subr.mxu0 0.0
        %503 = vmatpush1.msra.mxu0 0.0
        %504 = vmatprep.subr.mxu0 0.0
        %505 = vmatpush1.msra.mxu0 0.0
        %506 = vmatprep.subr.mxu0 0.0
        %507 = vmatpush1.msra.mxu0 0.0
        %508 = vmatprep.subr.mxu0 0.0
        %509 = vmatpush1.msra.mxu0 0.0
        %510 = vmatprep.subr.mxu0 0.0
        %511 = vmatpush1.msra.mxu0 0.0
        %512 = vmatprep.subr.mxu0 0.0
        %513 = vmatpush1.msra.mxu0 0.0
        %514 = vmatprep.subr.mxu0 0.0
        %515 = vmatpush1.msra.mxu0 0.0
        %516 = vmatprep.subr.mxu0 0.0
        %517 = vmatpush1.msra.mxu0 0.0
        %518 = vmatprep.subr.mxu0 0.0
        %519 = vmatpush1.msra.mxu0 0.0
        %520 = vmatprep.subr.mxu0 0.0
        %521 = vmatpush1.msra.mxu0 0.0
        %522 = vmatprep.subr.mxu0 0.0
        %523 = vmatpush1.msra.mxu0 0.0
        %524 = vmatprep.subr.mxu0 0.0
        %525 = vmatpush1.msra.mxu0 0.0
        %526 = vmatprep.subr.mxu0 0.0
        %527 = vmatpush1.msra.mxu0 0.0
        %528 = vmatprep.subr.mxu0 0.0
        %529 = vmatpush1.msra.mxu0 0.0
        %530 = vmatprep.subr.mxu0 0.0
        %531 = vmatpush1.msra.mxu0 0.0
        %532 = vmatprep.subr.mxu0 0.0
        %533 = vmatpush1.msra.mxu0 0.0
        %534 = vmatprep.subr.mxu0 0.0
        %535 = vmatpush1.msra.mxu0 0.0
        %536 = vmatprep.subr.mxu0 0.0
        %537 = vmatpush1.msra.mxu0 0.0
        %538 = vmatprep.subr.mxu0 0.0
        %539 = vmatpush1.msra.mxu0 0.0
        %540 = vmatprep.subr.mxu0 0.0
        %541 = vmatpush1.msra.mxu0 0.0
        %542 = vmatprep.subr.mxu0 0.0
        %543 = vmatpush1.msra.mxu0 0.0
        %544 = vmatprep.mubr.f32.mxu0 0.0
        %v545 = vand.u32 %v252, 4294901760
        %v546 = vsub.f32 %v252, %v545
        %547 = vmatmul.mubr.f32.gmra.mrb[0].mxu0 %v546
        %v548 = vpop.f32.mrb[0].mxu0
        %v549 = vadd.f32 %v457, %v548
        %v550 = vpop.f32.mrb[0].mxu0
        %551 = vdwg.mxu0
        %552 = vmatprep.subr.mxu0 0.0
        %v553 = vand.u32 %v230, 4294901760
        %554 = vmatpush1.msra.mxu0 %v553
        %555 = vmatprep.subr.mxu0 0.0
        %v556 = vand.u32 %v231, 4294901760
        %557 = vmatpush1.msra.mxu0 %v556
        %558 = vmatprep.subr.mxu0 0.0
        %v559 = vand.u32 %v232, 4294901760
        %560 = vmatpush1.msra.mxu0 %v559
        %561 = vmatprep.subr.mxu0 0.0
        %v562 = vand.u32 %v233, 4294901760
        %563 = vmatpush1.msra.mxu0 %v562
        %564 = vmatprep.subr.mxu0 0.0
        %v565 = vand.u32 %v234, 4294901760
        %566 = vmatpush1.msra.mxu0 %v565
        %567 = vmatprep.subr.mxu0 0.0
        %v568 = vand.u32 %v235, 4294901760
        %569 = vmatpush1.msra.mxu0 %v568
        %570 = vmatprep.subr.mxu0 0.0
        %v571 = vand.u32 %v236, 4294901760
        %572 = vmatpush1.msra.mxu0 %v571
        %573 = vmatprep.subr.mxu0 0.0
        %v574 = vand.u32 %v237, 4294901760
        %575 = vmatpush1.msra.mxu0 %v574
        %576 = vmatprep.subr.mxu0 0.0
        %v577 = vand.u32 %v238, 4294901760
        %578 = vmatpush1.msra.mxu0 %v577
        %579 = vmatprep.subr.mxu0 0.0
        %v580 = vand.u32 %v239, 4294901760
        %581 = vmatpush1.msra.mxu0 %v580
        %582 = vmatprep.subr.mxu0 0.0
        %583 = vmatpush1.msra.mxu0 0.0
        %584 = vmatprep.subr.mxu0 0.0
        %585 = vmatpush1.msra.mxu0 0.0
        %586 = vmatprep.subr.mxu0 0.0
        %587 = vmatpush1.msra.mxu0 0.0
        %588 = vmatprep.subr.mxu0 0.0
        %589 = vmatpush1.msra.mxu0 0.0
        %590 = vmatprep.subr.mxu0 0.0
        %591 = vmatpush1.msra.mxu0 0.0
        %592 = vmatprep.subr.mxu0 0.0
        %593 = vmatpush1.msra.mxu0 0.0
        %594 = vmatprep.subr.mxu0 0.0
        %595 = vmatpush1.msra.mxu0 0.0
        %596 = vmatprep.subr.mxu0 0.0
        %597 = vmatpush1.msra.mxu0 0.0
        %598 = vmatprep.subr.mxu0 0.0
        %599 = vmatpush1.msra.mxu0 0.0
        %600 = vmatprep.subr.mxu0 0.0
        %601 = vmatpush1.msra.mxu0 0.0
        %602 = vmatprep.subr.mxu0 0.0
        %603 = vmatpush1.msra.mxu0 0.0
        %604 = vmatprep.subr.mxu0 0.0
        %605 = vmatpush1.msra.mxu0 0.0
        %606 = vmatprep.subr.mxu0 0.0
        %607 = vmatpush1.msra.mxu0 0.0
        %608 = vmatprep.subr.mxu0 0.0
        %609 = vmatpush1.msra.mxu0 0.0
        %610 = vmatprep.subr.mxu0 0.0
        %611 = vmatpush1.msra.mxu0 0.0
        %612 = vmatprep.subr.mxu0 0.0
        %613 = vmatpush1.msra.mxu0 0.0
        %614 = vmatprep.subr.mxu0 0.0
        %615 = vmatpush1.msra.mxu0 0.0
        %616 = vmatprep.subr.mxu0 0.0
        %617 = vmatpush1.msra.mxu0 0.0
        %618 = vmatprep.subr.mxu0 0.0
        %619 = vmatpush1.msra.mxu0 0.0
        %620 = vmatprep.subr.mxu0 0.0
        %621 = vmatpush1.msra.mxu0 0.0
        %622 = vmatprep.subr.mxu0 0.0
        %623 = vmatpush1.msra.mxu0 0.0
        %624 = vmatprep.subr.mxu0 0.0
        %625 = vmatpush1.msra.mxu0 0.0
        %626 = vmatprep.mubr.f32.mxu0 0.0
        %v627 = vand.u32 %v252, 4294901760
        %v628 = vsub.f32 %v252, %v627
        %v629 = vand.u32 %v628, 4294901760
        %630 = vmatmul.mubr.f32.gmra.mrb[0].mxu0 %v629
        %v631 = vpop.f32.mrb[0].mxu0
        %v632 = vadd.f32 %v549, %v631
        %v633 = vpop.f32.mrb[0].mxu0
        %634 = vdwg.mxu0
        %635 = vmatprep.subr.mxu0 0.0
        %v636 = vand.u32 %v230, 4294901760
        %v637 = vsub.f32 %v230, %v636
        %v638 = vand.u32 %v637, 4294901760
        %639 = vmatpush1.msra.mxu0 %v638
        %640 = vmatprep.subr.mxu0 0.0
        %v641 = vand.u32 %v231, 4294901760
        %v642 = vsub.f32 %v231, %v641
        %v643 = vand.u32 %v642, 4294901760
        %644 = vmatpush1.msra.mxu0 %v643
        %645 = vmatprep.subr.mxu0 0.0
        %v646 = vand.u32 %v232, 4294901760
        %v647 = vsub.f32 %v232, %v646
        %v648 = vand.u32 %v647, 4294901760
        %649 = vmatpush1.msra.mxu0 %v648
        %650 = vmatprep.subr.mxu0 0.0
        %v651 = vand.u32 %v233, 4294901760
        %v652 = vsub.f32 %v233, %v651
        %v653 = vand.u32 %v652, 4294901760
        %654 = vmatpush1.msra.mxu0 %v653
        %655 = vmatprep.subr.mxu0 0.0
        %v656 = vand.u32 %v234, 4294901760
        %v657 = vsub.f32 %v234, %v656
        %v658 = vand.u32 %v657, 4294901760
        %659 = vmatpush1.msra.mxu0 %v658
        %660 = vmatprep.subr.mxu0 0.0
        %v661 = vand.u32 %v235, 4294901760
        %v662 = vsub.f32 %v235, %v661
        %v663 = vand.u32 %v662, 4294901760
        %664 = vmatpush1.msra.mxu0 %v663
        %665 = vmatprep.subr.mxu0 0.0
        %v666 = vand.u32 %v236, 4294901760
        %v667 = vsub.f32 %v236, %v666
        %v668 = vand.u32 %v667, 4294901760
        %669 = vmatpush1.msra.mxu0 %v668
        %670 = vmatprep.subr.mxu0 0.0
        %v671 = vand.u32 %v237, 4294901760
        %v672 = vsub.f32 %v237, %v671
        %v673 = vand.u32 %v672, 4294901760
        %674 = vmatpush1.msra.mxu0 %v673
        %675 = vmatprep.subr.mxu0 0.0
        %v676 = vand.u32 %v238, 4294901760
        %v677 = vsub.f32 %v238, %v676
        %v678 = vand.u32 %v677, 4294901760
        %679 = vmatpush1.msra.mxu0 %v678
        %680 = vmatprep.subr.mxu0 0.0
        %v681 = vand.u32 %v239, 4294901760
        %v682 = vsub.f32 %v239, %v681
        %v683 = vand.u32 %v682, 4294901760
        %684 = vmatpush1.msra.mxu0 %v683
        %685 = vmatprep.subr.mxu0 0.0
        %686 = vmatpush1.msra.mxu0 0.0
        %687 = vmatprep.subr.mxu0 0.0
        %688 = vmatpush1.msra.mxu0 0.0
        %689 = vmatprep.subr.mxu0 0.0
        %690 = vmatpush1.msra.mxu0 0.0
        %691 = vmatprep.subr.mxu0 0.0
        %692 = vmatpush1.msra.mxu0 0.0
        %693 = vmatprep.subr.mxu0 0.0
        %694 = vmatpush1.msra.mxu0 0.0
        %695 = vmatprep.subr.mxu0 0.0
        %696 = vmatpush1.msra.mxu0 0.0
        %697 = vmatprep.subr.mxu0 0.0
        %698 = vmatpush1.msra.mxu0 0.0
        %699 = vmatprep.subr.mxu0 0.0
        %700 = vmatpush1.msra.mxu0 0.0
        %701 = vmatprep.subr.mxu0 0.0
        %702 = vmatpush1.msra.mxu0 0.0
        %703 = vmatprep.subr.mxu0 0.0
        %704 = vmatpush1.msra.mxu0 0.0
        %705 = vmatprep.subr.mxu0 0.0
        %706 = vmatpush1.msra.mxu0 0.0
        %707 = vmatprep.subr.mxu0 0.0
        %708 = vmatpush1.msra.mxu0 0.0
        %709 = vmatprep.subr.mxu0 0.0
        %710 = vmatpush1.msra.mxu0 0.0
        %711 = vmatprep.subr.mxu0 0.0
        %712 = vmatpush1.msra.mxu0 0.0
        %713 = vmatprep.subr.mxu0 0.0
        %714 = vmatpush1.msra.mxu0 0.0
        %715 = vmatprep.subr.mxu0 0.0
        %716 = vmatpush1.msra.mxu0 0.0
        %717 = vmatprep.subr.mxu0 0.0
        %718 = vmatpush1.msra.mxu0 0.0
        %719 = vmatprep.subr.mxu0 0.0
        %720 = vmatpush1.msra.mxu0 0.0
        %721 = vmatprep.subr.mxu0 0.0
        %722 = vmatpush1.msra.mxu0 0.0
        %723 = vmatprep.subr.mxu0 0.0
        %724 = vmatpush1.msra.mxu0 0.0
        %725 = vmatprep.subr.mxu0 0.0
        %726 = vmatpush1.msra.mxu0 0.0
        %727 = vmatprep.subr.mxu0 0.0
        %728 = vmatpush1.msra.mxu0 0.0
        %729 = vmatprep.mubr.f32.mxu0 0.0
        %v730 = vand.u32 %v252, 4294901760
        %731 = vmatmul.mubr.f32.gmra.mrb[0].mxu0 %v730
        %v732 = vpop.f32.mrb[0].mxu0
        %v733 = vadd.f32 %v632, %v732
        %v734 = vpop.f32.mrb[0].mxu0
        %735 = vdwg.mxu0
        %736 = vmatprep.subr.mxu0 0.0
        %v737 = vand.u32 %v230, 4294901760
        %738 = vmatpush1.msra.mxu0 %v737
        %739 = vmatprep.subr.mxu0 0.0
        %v740 = vand.u32 %v231, 4294901760
        %741 = vmatpush1.msra.mxu0 %v740
        %742 = vmatprep.subr.mxu0 0.0
        %v743 = vand.u32 %v232, 4294901760
        %744 = vmatpush1.msra.mxu0 %v743
        %745 = vmatprep.subr.mxu0 0.0
        %v746 = vand.u32 %v233, 4294901760
        %747 = vmatpush1.msra.mxu0 %v746
        %748 = vmatprep.subr.mxu0 0.0
        %v749 = vand.u32 %v234, 4294901760
        %750 = vmatpush1.msra.mxu0 %v749
        %751 = vmatprep.subr.mxu0 0.0
        %v752 = vand.u32 %v235, 4294901760
        %753 = vmatpush1.msra.mxu0 %v752
        %754 = vmatprep.subr.mxu0 0.0
        %v755 = vand.u32 %v236, 4294901760
        %756 = vmatpush1.msra.mxu0 %v755
        %757 = vmatprep.subr.mxu0 0.0
        %v758 = vand.u32 %v237, 4294901760
        %759 = vmatpush1.msra.mxu0 %v758
        %760 = vmatprep.subr.mxu0 0.0
        %v761 = vand.u32 %v238, 4294901760
        %762 = vmatpush1.msra.mxu0 %v761
        %763 = vmatprep.subr.mxu0 0.0
        %v764 = vand.u32 %v239, 4294901760
        %765 = vmatpush1.msra.mxu0 %v764
        %766 = vmatprep.subr.mxu0 0.0
        %767 = vmatpush1.msra.mxu0 0.0
        %768 = vmatprep.subr.mxu0 0.0
        %769 = vmatpush1.msra.mxu0 0.0
        %770 = vmatprep.subr.mxu0 0.0
        %771 = vmatpush1.msra.mxu0 0.0
        %772 = vmatprep.subr.mxu0 0.0
        %773 = vmatpush1.msra.mxu0 0.0
        %774 = vmatprep.subr.mxu0 0.0
        %775 = vmatpush1.msra.mxu0 0.0
        %776 = vmatprep.subr.mxu0 0.0
        %777 = vmatpush1.msra.mxu0 0.0
        %778 = vmatprep.subr.mxu0 0.0
        %779 = vmatpush1.msra.mxu0 0.0
        %780 = vmatprep.subr.mxu0 0.0
        %781 = vmatpush1.msra.mxu0 0.0
        %782 = vmatprep.subr.mxu0 0.0
        %783 = vmatpush1.msra.mxu0 0.0
        %784 = vmatprep.subr.mxu0 0.0
        %785 = vmatpush1.msra.mxu0 0.0
        %786 = vmatprep.subr.mxu0 0.0
        %787 = vmatpush1.msra.mxu0 0.0
        %788 = vmatprep.subr.mxu0 0.0
        %789 = vmatpush1.msra.mxu0 0.0
        %790 = vmatprep.subr.mxu0 0.0
        %791 = vmatpush1.msra.mxu0 0.0
        %792 = vmatprep.subr.mxu0 0.0
        %793 = vmatpush1.msra.mxu0 0.0
        %794 = vmatprep.subr.mxu0 0.0
        %795 = vmatpush1.msra.mxu0 0.0
        %796 = vmatprep.subr.mxu0 0.0
        %797 = vmatpush1.msra.mxu0 0.0
        %798 = vmatprep.subr.mxu0 0.0
        %799 = vmatpush1.msra.mxu0 0.0
        %800 = vmatprep.subr.mxu0 0.0
        %801 = vmatpush1.msra.mxu0 0.0
        %802 = vmatprep.subr.mxu0 0.0
        %803 = vmatpush1.msra.mxu0 0.0
        %804 = vmatprep.subr.mxu0 0.0
        %805 = vmatpush1.msra.mxu0 0.0
        %806 = vmatprep.subr.mxu0 0.0
        %807 = vmatpush1.msra.mxu0 0.0
        %808 = vmatprep.subr.mxu0 0.0
        %809 = vmatpush1.msra.mxu0 0.0
        %810 = vmatprep.mubr.f32.mxu0 0.0
        %v811 = vand.u32 %v252, 4294901760
        %812 = vmatmul.mubr.f32.gmra.mrb[0].mxu0 %v811
        %v813 = vpop.f32.mrb[0].mxu0
        %v814 = vadd.f32 %v733, %v813
        %v815 = vpop.f32.mrb[0].mxu0
        %816 = vdwg.mxu0
        %v817 = vtanh.pop %v814
        %818 = vst [vmem:[%s228] sm:$0xff] %v817
        %p819 = scmp.lt.s32.totalorder %s20, 1
        %s820 = scalar_select %p819, %s20, 1
        %s821 = smul.addr %s820, 8
        %s822 = scalar_lea.vmem %s4, %s821
        // Predicated region
        $region45: #{perturb_func.1} parent=35 // pred_check
          %p823 = pneg %p127
        $region46: #{perturb_func.1} parent=35 // pred_check_branch
          %825 = sbr.rel (%p823) target = $region48
        $region47: #{perturb_func.1} parent=35 // pred_region
          _
        $region48: #{perturb_func.1} parent=35 // pred_fallthru
          _
      $region36: #{perturb_func.1} parent=5 // pred_fallthru
        _
      %p826 = scmp.le.s32.totalorder 2, %s15
      // Predicated region
      $region49: #{perturb_func.1} parent=5 // pred_check
        %p827 = pneg %p826
      $region50: #{perturb_func.1} parent=5 // pred_check_branch
        %829 = sbr.rel (%p827) target = $region52
      $region51: #{perturb_func.1} parent=5 // pred_region
        %s830 = ssub.s32 %s15, 2
        // Predicated region
        $region53: #{perturb_func.1} parent=51 // pred_check
          %p831 = pneg %p133
        $region54: #{perturb_func.1} parent=51 // pred_check_branch
          %833 = sbr.rel (%p831) target = $region56
        $region55: #{perturb_func.1} parent=51 // pred_region
          %p834 = scmp.lt.s32.totalorder %s21, 1
          %s835 = scalar_select %p834, %s21, 1
          %s836 = smul.addr %s835, 8
          %s837 = scalar_lea.vmem %s4, %s836
        $region56: #{perturb_func.1} parent=51 // pred_fallthru
          _
      $region52: #{perturb_func.1} parent=5 // pred_fallthru
        _
    $region6: #{perturb_func.1} parent=1 // loop_footer
      %s19 = sadd.s32 1, %s15
    $region7: #{perturb_func.1} parent=1 // loop_footer_branch
      %14 = sbr.rel target = $region3
    $region8: #{perturb_func.1} parent=1 // loop_exit
      _
    %838 = vsyncpa [#allocation4], 1
    %s839 = scalar_lea.sflag [#allocation4], 1
    %840 = vsyncpa %s839, 1
    %841 = vsyncpa [#allocation6], 1

</llo_original>
